<compile_context>
chip_gen: v7x
topology: tpu7x:2x2x1
jax: 0.10.0
libtpu: 0.0.40
codegen_flags: <defaults>
</compile_context>

<pallas_src>
import jax
import jax.numpy as jnp
from jax.experimental import pallas as pl
from jax.experimental.pallas import tpu as pltpu


def _make_attention_kernel(n, g):
    """Kernel over n stacked inputs; g = batch rows folded into the 128-lane dim."""

    def kernel(*refs):
        x_refs = refs[:n]                          # n blocks of (tb, lanes)
        w_ref = refs[n]                            # g==1: (1, C)   ; g>1: (lanes, g) block weight
        e_ref = refs[n + 1] if g > 1 else None     # g>1: (g, lanes) expand-to-lanes matrix
        o_ref = refs[-1]                           # (tb, lanes)

        w = w_ref[...]

        # ---- pass 1: one tiny score column per stacked input; slabs are streamed ----
        scores = []
        for i in range(n):
            x = x_refs[i][...].astype(jnp.float32)
            if g == 1:
                # VPU multiply + single lane-reduce (the only unavoidable XLU op).
                s = jnp.sum(x * w, axis=-1, keepdims=True)                 # (tb, 1)
            else:
                # Segmented per-sub-row reduce via a tiny MXU matmul (MXU is idle anyway).
                s = jnp.dot(x, w, preferred_element_type=jnp.float32)      # (tb, g)
            scores.append(s)
        # (Linear bias omitted: same scalar added to every score -> softmax no-op.)

        # ---- softmax over the stack axis: pairwise VPU max/add + EUP exp/reciprocal ----
        m = scores[0]
        for s in scores[1:]:
            m = jnp.maximum(m, s)
        exps = [jnp.exp(s - m) for s in scores]
        denom = exps[0]
        for e in exps[1:]:
            denom = denom + e
        inv = pl.reciprocal(denom, approx=True)    # EUP slot, effectively free

        # ---- pass 2: weighted accumulate, one (tb, lanes) slab live at a time ----
        acc = None
        for i in range(n):
            x = x_refs[i][...].astype(jnp.float32)
            p = exps[i] * inv                                              # (tb, g)
            if g == 1:
                contrib = x * p                                            # lane broadcast
            else:
                p_lanes = jnp.dot(p, e_ref[...],
                                  preferred_element_type=jnp.float32)      # (tb, lanes)
                contrib = x * p_lanes
            acc = contrib if acc is None else acc + contrib
        o_ref[...] = acc.astype(o_ref.dtype)

    return kernel


_VMEM_BUDGET_BYTES = 40 * 1024 * 1024   # conservative: fits v7x's 64 MiB physical VMEM
_MAX_TILE_ROWS = 1024                   # diminishing returns past ~512-1024 rows / grid step
_VMEM_LIMIT_CAP = 56 * 1024 * 1024


def _pick_tile_rows(bp, n, lanes, in_bytes, out_bytes):
    """Rows per grid step: as big as the VMEM budget allows, but keep >= 2 grid steps."""
    if bp <= 8:
        return bp                        # single full-extent tile (exempt from the (8,128) rule)
    mult = 16 if min(in_bytes, out_bytes) < 4 else 8
    per_row = 2 * n * lanes * in_bytes + 2 * lanes * out_bytes   # double-buffered in + out
    tb = min(_VMEM_BUDGET_BYTES // per_row, _MAX_TILE_ROWS)
    half = -(-bp // 2)                   # ceil(bp/2): >= 2 steps so both v7x TCs get work
    half = -(-half // mult) * mult
    tb = min(tb, half)
    return max(mult, (tb // mult) * mult)


def attention(inputs, weight, bias=None, *, out_dtype=None):
    """Pallas TPU forward of STransfer `Attention`.

    inputs : list of N arrays, each (B, C)  (float32 or bfloat16; bf16 halves HBM traffic)
    weight : (1, C) torch-layout nn.Linear(C, 1) weight (or (C,))
    bias   : optional Linear bias -- accepted for API fidelity, mathematically a softmax no-op
    returns: (B, C) in `out_dtype` (defaults to the input dtype); accumulation is float32.
    """
    del bias  # constant shift along the softmax axis -> no effect on the output
    n = len(inputs)
    B, C = inputs[0].shape
    assert all(x.shape == (B, C) for x in inputs)
    in_dtype = inputs[0].dtype
    out_dtype = in_dtype if out_dtype is None else out_dtype
    in_bytes = jnp.dtype(in_dtype).itemsize
    out_bytes = jnp.dtype(out_dtype).itemsize

    w_row = jnp.asarray(weight, jnp.float32).reshape(1, C)

    # Fold g = 128 // C batch rows into the lane dim when C is a small divisor of 128:
    # full-width output stores, no 128/C-x lane padding of VMEM tiles.
    g = 128 // C if (C < 128 and 128 % C == 0) else 1
    lanes = g * C

    bp = -(-B // g)                                   # packed rows before tiling/padding
    tb = _pick_tile_rows(bp, n, lanes, in_bytes, out_bytes)
    bp_pad = -(-bp // tb) * tb
    b_pad = bp_pad * g
    grid = (bp_pad // tb,)

    def _prep(x):
        if b_pad != B:
            # TODO(synk): tile-aligned batches avoid this one extra HBM copy of the inputs.
            x = jnp.pad(x, ((0, b_pad - B), (0, 0)))
        return x.reshape(bp_pad, lanes)               # free row-major reshape (fold rows->lanes)

    operands = [_prep(x) for x in inputs]
    x_spec = pl.BlockSpec((tb, lanes), lambda i: (i, 0))
    in_specs = [x_spec] * n

    if g == 1:
        in_specs.append(pl.BlockSpec((1, C), lambda i: (0, 0)))          # broadcast weight row
        operands.append(w_row)
    else:
        # Block weight: W_blk[j*C + c, k] = w[c] * delta(j, k)  (shape (lanes, g))
        w_blk = jnp.einsum("c,jk->jck", w_row[0],
                           jnp.eye(g, dtype=jnp.float32)).reshape(lanes, g)
        # Expand matrix: E[k, j*C + c] = delta(k, j)            (shape (g, lanes))
        expand = jnp.kron(jnp.eye(g, dtype=jnp.float32), jnp.ones((1, C), jnp.float32))
        in_specs.append(pl.BlockSpec((lanes, g), lambda i: (0, 0)))
        in_specs.append(pl.BlockSpec((g, lanes), lambda i: (0, 0)))
        operands += [w_blk, expand]

    vmem_used = tb * (2 * n * lanes * in_bytes + 2 * lanes * out_bytes) + 4 * lanes * 128 * 4
    vmem_limit = int(min(_VMEM_LIMIT_CAP, vmem_used + (8 << 20)))

    out = pl.pallas_call(
        _make_attention_kernel(n, g),
        out_shape=jax.ShapeDtypeStruct((bp_pad, lanes), out_dtype),
        grid=grid,
        in_specs=in_specs,
        out_specs=pl.BlockSpec((tb, lanes), lambda i: (i, 0)),
        compiler_params=pltpu.CompilerParams(
            dimension_semantics=("parallel",),    # rows independent -> shard across TCs
            vmem_limit_bytes=vmem_limit,
        ),
    )(*operands)

    out = out.reshape(b_pad, C)
    if b_pad != B:
        out = out[:B]
    return out


if __name__ == "__main__":
    def reference(inputs, w, b):
        stacked = jnp.stack([x.astype(jnp.float32) for x in inputs], axis=1)
        scores = jnp.einsum("bnc,c->bn", stacked, jnp.asarray(w, jnp.float32).reshape(-1)) + b
        p = jax.nn.softmax(scores, axis=1)
        return jnp.sum(stacked * p[:, :, None], axis=1)

    root = jax.random.PRNGKey(0)
    k_a, k_b = jax.random.split(root)

    # --- test 1: small-C fold path (C=32 -> 4 batch rows folded into the 128 lanes), f32 ---
    B, N, C = 16, 4, 32
    keys = jax.random.split(k_a, N + 2)
    inputs = [jax.random.normal(keys[i], (B, C), jnp.float32) for i in range(N)]
    lim = 1.0 / (C ** 0.5)
    w = jax.random.uniform(keys[N], (1, C), jnp.float32, -lim, lim)
    b = jax.random.uniform(keys[N + 1], (), jnp.float32, -lim, lim)

    out = attention(inputs, w, b)
    jax.block_until_ready(out)
    ref = reference(inputs, w, b)
    assert out.shape == (B, C) and out.dtype == jnp.float32
    # approx EUP reciprocal in the softmax denominator -> sub-percent-level tolerance
    assert jnp.allclose(out, ref, atol=5e-3, rtol=5e-3)

    # --- test 2: same problem with bf16 activations (half the HBM bytes), f32 accumulate ---
    inputs_bf16 = [x.astype(jnp.bfloat16) for x in inputs]
    out_bf16 = attention(inputs_bf16, w, b)
    jax.block_until_ready(out_bf16)
    ref_bf16 = reference([x.astype(jnp.float32) for x in inputs_bf16], w, b)
    assert out_bf16.dtype == jnp.bfloat16
    assert jnp.allclose(out_bf16.astype(jnp.float32), ref_bf16, atol=3e-2, rtol=3e-2)

    # --- test 3: lane-native path (C=128, no folding) with >= 2 grid steps (v7x megacore) ---
    B2, N2, C2 = 32, 3, 128
    keys2 = jax.random.split(k_b, N2 + 2)
    inputs2 = [jax.random.normal(keys2[i], (B2, C2), jnp.float32) for i in range(N2)]
    lim2 = 1.0 / (C2 ** 0.5)
    w2 = jax.random.uniform(keys2[N2], (1, C2), jnp.float32, -lim2, lim2)
    b2 = jax.random.uniform(keys2[N2 + 1], (), jnp.float32, -lim2, lim2)

    out2 = attention(inputs2, w2, b2)
    jax.block_until_ready(out2)
    ref2 = reference(inputs2, w2, b2)
    assert out2.shape == (B2, C2)
    assert jnp.allclose(out2, ref2, atol=5e-3, rtol=5e-3)

    print("KERNEL_OK")
</pallas_src>

<mosaic_0001>
module attributes {stable_mosaic.version = 11 : i64} {
  func.func @kernel(%arg0: i32, %arg1: memref<4x128xf32, #tpu.memory_space<vmem>>, %arg2: memref<4x128xf32, #tpu.memory_space<vmem>>, %arg3: memref<4x128xf32, #tpu.memory_space<vmem>>, %arg4: memref<4x128xf32, #tpu.memory_space<vmem>>, %arg5: memref<128x4xf32, #tpu.memory_space<vmem>>, %arg6: memref<4x128xf32, #tpu.memory_space<vmem>>, %arg7: memref<4x128xf32, #tpu.memory_space<vmem>>) attributes {dimension_semantics = [#tpu.dimension_semantics<parallel>], iteration_bounds = array<i64: 1>, scalar_prefetch = 0 : i64, scratch_operands = 0 : i64, tpu.core_type = #tpu.core_type<tc>, window_params = [{transform_indices = @transform_0, window_bounds = array<i64: 4, 128>}, {transform_indices = @transform_1, window_bounds = array<i64: 4, 128>}, {transform_indices = @transform_2, window_bounds = array<i64: 4, 128>}, {transform_indices = @transform_3, window_bounds = array<i64: 4, 128>}, {pipeline_mode = #tpu.pipeline_mode<synchronous>, transform_indices = @transform_4, window_bounds = array<i64: 128, 4>}, {pipeline_mode = #tpu.pipeline_mode<synchronous>, transform_indices = @transform_5, window_bounds = array<i64: 4, 128>}, {transform_indices = @transform_6, window_bounds = array<i64: 4, 128>}]} {
    %c0 = arith.constant 0 : index
    %c0_0 = arith.constant 0 : index
    %0 = vector.load %arg5[%c0, %c0_0] : memref<128x4xf32, #tpu.memory_space<vmem>>, vector<128x4xf32>
    %c0_1 = arith.constant 0 : index
    %c0_2 = arith.constant 0 : index
    %1 = vector.load %arg1[%c0_1, %c0_2] : memref<4x128xf32, #tpu.memory_space<vmem>>, vector<4x128xf32>
    %cst = arith.constant dense<0.000000e+00> : vector<4x4xf32>
    %2 = tpu.matmul %1, %0, %cst {dimension_numbers = #tpu.dot_dimension_numbers<[1], [0], [0], [1], [0, 0, 1, 1], [], []>} : vector<4x128xf32>, vector<128x4xf32>, vector<4x4xf32> -> vector<4x4xf32>
    %c0_3 = arith.constant 0 : index
    %c0_4 = arith.constant 0 : index
    %3 = vector.load %arg2[%c0_3, %c0_4] : memref<4x128xf32, #tpu.memory_space<vmem>>, vector<4x128xf32>
    %cst_5 = arith.constant dense<0.000000e+00> : vector<4x4xf32>
    %4 = tpu.matmul %3, %0, %cst_5 {dimension_numbers = #tpu.dot_dimension_numbers<[1], [0], [0], [1], [0, 0, 1, 1], [], []>} : vector<4x128xf32>, vector<128x4xf32>, vector<4x4xf32> -> vector<4x4xf32>
    %c0_6 = arith.constant 0 : index
    %c0_7 = arith.constant 0 : index
    %5 = vector.load %arg3[%c0_6, %c0_7] : memref<4x128xf32, #tpu.memory_space<vmem>>, vector<4x128xf32>
    %cst_8 = arith.constant dense<0.000000e+00> : vector<4x4xf32>
    %6 = tpu.matmul %5, %0, %cst_8 {dimension_numbers = #tpu.dot_dimension_numbers<[1], [0], [0], [1], [0, 0, 1, 1], [], []>} : vector<4x128xf32>, vector<128x4xf32>, vector<4x4xf32> -> vector<4x4xf32>
    %c0_9 = arith.constant 0 : index
    %c0_10 = arith.constant 0 : index
    %7 = vector.load %arg4[%c0_9, %c0_10] : memref<4x128xf32, #tpu.memory_space<vmem>>, vector<4x128xf32>
    %cst_11 = arith.constant dense<0.000000e+00> : vector<4x4xf32>
    %8 = tpu.matmul %7, %0, %cst_11 {dimension_numbers = #tpu.dot_dimension_numbers<[1], [0], [0], [1], [0, 0, 1, 1], [], []>} : vector<4x128xf32>, vector<128x4xf32>, vector<4x4xf32> -> vector<4x4xf32>
    %9 = arith.maximumf %2, %4 : vector<4x4xf32>
    %10 = arith.maximumf %9, %6 : vector<4x4xf32>
    %11 = arith.maximumf %10, %8 : vector<4x4xf32>
    %12 = arith.subf %2, %11 : vector<4x4xf32>
    %13 = math.exp %12 : vector<4x4xf32>
    %14 = arith.subf %4, %11 : vector<4x4xf32>
    %15 = math.exp %14 : vector<4x4xf32>
    %16 = arith.subf %6, %11 : vector<4x4xf32>
    %17 = math.exp %16 : vector<4x4xf32>
    %18 = arith.subf %8, %11 : vector<4x4xf32>
    %19 = math.exp %18 : vector<4x4xf32>
    %20 = arith.addf %13, %15 : vector<4x4xf32>
    %21 = arith.addf %20, %17 : vector<4x4xf32>
    %22 = arith.addf %21, %19 : vector<4x4xf32>
    %23 = tpu.reciprocal %22 {approx = true} : vector<4x4xf32> -> vector<4x4xf32>
    %c0_12 = arith.constant 0 : index
    %c0_13 = arith.constant 0 : index
    %24 = vector.load %arg1[%c0_12, %c0_13] : memref<4x128xf32, #tpu.memory_space<vmem>>, vector<4x128xf32>
    %25 = arith.mulf %13, %23 : vector<4x4xf32>
    %c0_14 = arith.constant 0 : index
    %c0_15 = arith.constant 0 : index
    %26 = vector.load %arg6[%c0_14, %c0_15] : memref<4x128xf32, #tpu.memory_space<vmem>>, vector<4x128xf32>
    %cst_16 = arith.constant dense<0.000000e+00> : vector<4x128xf32>
    %27 = tpu.matmul %25, %26, %cst_16 {dimension_numbers = #tpu.dot_dimension_numbers<[1], [0], [0], [1], [0, 0, 1, 1], [], []>} : vector<4x4xf32>, vector<4x128xf32>, vector<4x128xf32> -> vector<4x128xf32>
    %28 = arith.mulf %24, %27 : vector<4x128xf32>
    %c0_17 = arith.constant 0 : index
    %c0_18 = arith.constant 0 : index
    %29 = vector.load %arg2[%c0_17, %c0_18] : memref<4x128xf32, #tpu.memory_space<vmem>>, vector<4x128xf32>
    %30 = arith.mulf %15, %23 : vector<4x4xf32>
    %c0_19 = arith.constant 0 : index
    %c0_20 = arith.constant 0 : index
    %31 = vector.load %arg6[%c0_19, %c0_20] : memref<4x128xf32, #tpu.memory_space<vmem>>, vector<4x128xf32>
    %cst_21 = arith.constant dense<0.000000e+00> : vector<4x128xf32>
    %32 = tpu.matmul %30, %31, %cst_21 {dimension_numbers = #tpu.dot_dimension_numbers<[1], [0], [0], [1], [0, 0, 1, 1], [], []>} : vector<4x4xf32>, vector<4x128xf32>, vector<4x128xf32> -> vector<4x128xf32>
    %33 = arith.mulf %29, %32 : vector<4x128xf32>
    %34 = arith.addf %28, %33 : vector<4x128xf32>
    %c0_22 = arith.constant 0 : index
    %c0_23 = arith.constant 0 : index
    %35 = vector.load %arg3[%c0_22, %c0_23] : memref<4x128xf32, #tpu.memory_space<vmem>>, vector<4x128xf32>
    %36 = arith.mulf %17, %23 : vector<4x4xf32>
    %c0_24 = arith.constant 0 : index
    %c0_25 = arith.constant 0 : index
    %37 = vector.load %arg6[%c0_24, %c0_25] : memref<4x128xf32, #tpu.memory_space<vmem>>, vector<4x128xf32>
    %cst_26 = arith.constant dense<0.000000e+00> : vector<4x128xf32>
    %38 = tpu.matmul %36, %37, %cst_26 {dimension_numbers = #tpu.dot_dimension_numbers<[1], [0], [0], [1], [0, 0, 1, 1], [], []>} : vector<4x4xf32>, vector<4x128xf32>, vector<4x128xf32> -> vector<4x128xf32>
    %39 = arith.mulf %35, %38 : vector<4x128xf32>
    %40 = arith.addf %34, %39 : vector<4x128xf32>
    %c0_27 = arith.constant 0 : index
    %c0_28 = arith.constant 0 : index
    %41 = vector.load %arg4[%c0_27, %c0_28] : memref<4x128xf32, #tpu.memory_space<vmem>>, vector<4x128xf32>
    %42 = arith.mulf %19, %23 : vector<4x4xf32>
    %c0_29 = arith.constant 0 : index
    %c0_30 = arith.constant 0 : index
    %43 = vector.load %arg6[%c0_29, %c0_30] : memref<4x128xf32, #tpu.memory_space<vmem>>, vector<4x128xf32>
    %cst_31 = arith.constant dense<0.000000e+00> : vector<4x128xf32>
    %44 = tpu.matmul %42, %43, %cst_31 {dimension_numbers = #tpu.dot_dimension_numbers<[1], [0], [0], [1], [0, 0, 1, 1], [], []>} : vector<4x4xf32>, vector<4x128xf32>, vector<4x128xf32> -> vector<4x128xf32>
    %45 = arith.mulf %41, %44 : vector<4x128xf32>
    %46 = arith.addf %40, %45 : vector<4x128xf32>
    %c0_32 = arith.constant 0 : index
    %c0_33 = arith.constant 0 : index
    %47 = vector.load %arg7[%c0_32, %c0_33] : memref<4x128xf32, #tpu.memory_space<vmem>>, vector<4x128xf32>
    tpu.vector_store %arg7[%c0_32, %c0_33], %46 {strides = array<i32>} : memref<4x128xf32, #tpu.memory_space<vmem>>, vector<4x128xf32>,
    return
  }
  func.func @transform_0(%arg0: i32) -> (i32, i32) {
    %c0_i32 = arith.constant 0 : i32
    %c0_i32_0 = arith.constant 0 : i32
    return %arg0, %c0_i32 : i32, i32
  }
  func.func @transform_1(%arg0: i32) -> (i32, i32) {
    %c0_i32 = arith.constant 0 : i32
    %c0_i32_0 = arith.constant 0 : i32
    return %arg0, %c0_i32 : i32, i32
  }
  func.func @transform_2(%arg0: i32) -> (i32, i32) {
    %c0_i32 = arith.constant 0 : i32
    %c0_i32_0 = arith.constant 0 : i32
    return %arg0, %c0_i32 : i32, i32
  }
  func.func @transform_3(%arg0: i32) -> (i32, i32) {
    %c0_i32 = arith.constant 0 : i32
    %c0_i32_0 = arith.constant 0 : i32
    return %arg0, %c0_i32 : i32, i32
  }
  func.func @transform_4(%arg0: i32) -> (i32, i32) {
    %c0_i32 = arith.constant 0 : i32
    %c0_i32_0 = arith.constant 0 : i32
    %c0_i32_1 = arith.constant 0 : i32
    return %c0_i32, %c0_i32_0 : i32, i32
  }
  func.func @transform_5(%arg0: i32) -> (i32, i32) {
    %c0_i32 = arith.constant 0 : i32
    %c0_i32_0 = arith.constant 0 : i32
    %c0_i32_1 = arith.constant 0 : i32
    return %c0_i32, %c0_i32_0 : i32, i32
  }
  func.func @transform_6(%arg0: i32) -> (i32, i32) {
    %c0_i32 = arith.constant 0 : i32
    %c0_i32_0 = arith.constant 0 : i32
    return %arg0, %c0_i32 : i32, i32
  }
}

</mosaic_0001>

<llo_original>
// kernel: tpu_custom_call.1
$region0: #{tpu_custom_call.1}
  #allocation0 [shape = 'u32[]', space=smem, size = 0x4, offset = 0x4, fixed_abs, tag = 'smem constant byte address 0x4 - core index']
  #allocation1 [shape = 'u32[144,128]{1,0:T(1,128)}', space=vmem, size = 0x12000, scoped, tag = 'internal scratch']
  %s0 = inlined_call_operand.vmem [shape: f32[4,128], index: 0, kind: input, shape index: {}]
  %s1 = inlined_call_operand.vmem [shape: f32[4,128], index: 1, kind: input, shape index: {}]
  %s2 = inlined_call_operand.vmem [shape: f32[4,128], index: 2, kind: input, shape index: {}]
  %s3 = inlined_call_operand.vmem [shape: f32[4,128], index: 3, kind: input, shape index: {}]
  %s4 = inlined_call_operand.vmem [shape: f32[128,4], index: 4, kind: input, shape index: {}]
  %s5 = inlined_call_operand.vmem [shape: f32[4,128], index: 5, kind: input, shape index: {}]
  %s6 = inlined_call_operand.hbm [shape: f32[4,128], index: 6, kind: output, shape index: {}]
  %s7 = sld [smem:[#allocation0]]
  $region34: #{tpu_custom_call.1} parent=0
    _
  %s9 = ssub.s32 1, %s7
  %s10 = scalar_select 0, %s9, %s7
  $region1: #{tpu_custom_call.1} parent=0
    #allocation2 [shape = 'u8[2048]{0}', space=vmem, size = 0x800, scoped, tag = 'output window, operand 0, single buffered']
    #allocation3 [shape = 's32[1]{0}', space=sflag, size = 0x4, scoped, tag = 'scoped memory for tpu_custom_call.1']
    %11 = vsyncpa [#allocation3], 0
    // Predicated region
    $region2: #{tpu_custom_call.1} parent=1 // pred_check
      _
    $region3: #{tpu_custom_call.1} parent=1 // pred_check_branch
      %13 = sbr.rel (0) target = $region5
    $region4: #{tpu_custom_call.1} parent=1 // pred_region
      _
    $region5: #{tpu_custom_call.1} parent=1 // pred_fallthru
      _
    // Predicated region
    $region6: #{tpu_custom_call.1} parent=1 // pred_check
      _
    $region7: #{tpu_custom_call.1} parent=1 // pred_check_branch
      %15 = sbr.rel (0) target = $region9
    $region8: #{tpu_custom_call.1} parent=1 // pred_region
      _
    $region9: #{tpu_custom_call.1} parent=1 // pred_fallthru
      _
    // Predicated region
    $region10: #{tpu_custom_call.1} parent=1 // pred_check
      _
    $region11: #{tpu_custom_call.1} parent=1 // pred_check_branch
      %17 = sbr.rel (0) target = $region13
    $region12: #{tpu_custom_call.1} parent=1 // pred_region
      _
    $region13: #{tpu_custom_call.1} parent=1 // pred_fallthru
      _
    // Predicated region
    $region14: #{tpu_custom_call.1} parent=1 // pred_check
      _
    $region15: #{tpu_custom_call.1} parent=1 // pred_check_branch
      %19 = sbr.rel (0) target = $region17
    $region16: #{tpu_custom_call.1} parent=1 // pred_region
      _
    $region17: #{tpu_custom_call.1} parent=1 // pred_fallthru
      _
    // Predicated region
    $region18: #{tpu_custom_call.1} parent=1 // pred_check
      _
    $region19: #{tpu_custom_call.1} parent=1 // pred_check_branch
      %21 = sbr.rel (0) target = $region21
    $region20: #{tpu_custom_call.1} parent=1 // pred_region
      _
    $region21: #{tpu_custom_call.1} parent=1 // pred_fallthru
      _
    // Predicated region
    $region22: #{tpu_custom_call.1} parent=1 // pred_check
      _
    $region23: #{tpu_custom_call.1} parent=1 // pred_check_branch
      %23 = sbr.rel (0) target = $region25
    $region24: #{tpu_custom_call.1} parent=1 // pred_region
      _
    $region25: #{tpu_custom_call.1} parent=1 // pred_fallthru
      _
    %v24 = vld [vmem:[%s4] sm:$0xff]
    %v25 = vld [vmem:[%s4 + $0x8] sm:$0xff]
    %v26 = vld [vmem:[%s4 + $0x10] sm:$0xff]
    %v27 = vld [vmem:[%s4 + $0x18] sm:$0xff]
    %v28 = vld [vmem:[%s4 + $0x20] sm:$0xff]
    %v29 = vld [vmem:[%s4 + $0x28] sm:$0xff]
    %v30 = vld [vmem:[%s4 + $0x30] sm:$0xff]
    %v31 = vld [vmem:[%s4 + $0x38] sm:$0xff]
    %v32 = vld [vmem:[%s4 + $0x40] sm:$0xff]
    %v33 = vld [vmem:[%s4 + $0x48] sm:$0xff]
    %v34 = vld [vmem:[%s4 + $0x50] sm:$0xff]
    %v35 = vld [vmem:[%s4 + $0x58] sm:$0xff]
    %v36 = vld [vmem:[%s4 + $0x60] sm:$0xff]
    %v37 = vld [vmem:[%s4 + $0x68] sm:$0xff]
    %v38 = vld [vmem:[%s4 + $0x70] sm:$0xff]
    %v39 = vld [vmem:[%s4 + $0x78] sm:$0xff]
    %v40 = vld [vmem:[%s0] sm:$0xf]
    %41 = vmatprep.subr.mxu0 0.0
    %42 = vmatpush1.msra.mxu0 %v24
    %43 = vmatprep.subr.mxu0 0.0
    %44 = vmatpush1.msra.mxu0 %v25
    %45 = vmatprep.subr.mxu0 0.0
    %46 = vmatpush1.msra.mxu0 %v26
    %47 = vmatprep.subr.mxu0 0.0
    %48 = vmatpush1.msra.mxu0 %v27
    %49 = vmatprep.subr.mxu0 0.0
    %50 = vmatpush1.msra.mxu0 %v28
    %51 = vmatprep.subr.mxu0 0.0
    %52 = vmatpush1.msra.mxu0 %v29
    %53 = vmatprep.subr.mxu0 0.0
    %54 = vmatpush1.msra.mxu0 %v30
    %55 = vmatprep.subr.mxu0 0.0
    %56 = vmatpush1.msra.mxu0 %v31
    %57 = vmatprep.subr.mxu0 0.0
    %58 = vmatpush1.msra.mxu0 %v32
    %59 = vmatprep.subr.mxu0 0.0
    %60 = vmatpush1.msra.mxu0 %v33
    %61 = vmatprep.subr.mxu0 0.0
    %62 = vmatpush1.msra.mxu0 %v34
    %63 = vmatprep.subr.mxu0 0.0
    %64 = vmatpush1.msra.mxu0 %v35
    %65 = vmatprep.subr.mxu0 0.0
    %66 = vmatpush1.msra.mxu0 %v36
    %67 = vmatprep.subr.mxu0 0.0
    %68 = vmatpush1.msra.mxu0 %v37
    %69 = vmatprep.subr.mxu0 0.0
    %70 = vmatpush1.msra.mxu0 %v38
    %71 = vmatprep.subr.mxu0 0.0
    %72 = vmatpush1.msra.mxu0 %v39
    %73 = vmatprep.subr.mxu0 0.0
    %74 = vmatpush1.msra.mxu0 0.0
    %75 = vmatprep.subr.mxu0 0.0
    %76 = vmatpush1.msra.mxu0 0.0
    %77 = vmatprep.subr.mxu0 0.0
    %78 = vmatpush1.msra.mxu0 0.0
    %79 = vmatprep.subr.mxu0 0.0
    %80 = vmatpush1.msra.mxu0 0.0
    %81 = vmatprep.subr.mxu0 0.0
    %82 = vmatpush1.msra.mxu0 0.0
    %83 = vmatprep.subr.mxu0 0.0
    %84 = vmatpush1.msra.mxu0 0.0
    %85 = vmatprep.subr.mxu0 0.0
    %86 = vmatpush1.msra.mxu0 0.0
    %87 = vmatprep.subr.mxu0 0.0
    %88 = vmatpush1.msra.mxu0 0.0
    %89 = vmatprep.subr.mxu0 0.0
    %90 = vmatpush1.msra.mxu0 0.0
    %91 = vmatprep.subr.mxu0 0.0
    %92 = vmatpush1.msra.mxu0 0.0
    %93 = vmatprep.subr.mxu0 0.0
    %94 = vmatpush1.msra.mxu0 0.0
    %95 = vmatprep.subr.mxu0 0.0
    %96 = vmatpush1.msra.mxu0 0.0
    %97 = vmatprep.subr.mxu0 0.0
    %98 = vmatpush1.msra.mxu0 0.0
    %99 = vmatprep.subr.mxu0 0.0
    %100 = vmatpush1.msra.mxu0 0.0
    %101 = vmatprep.subr.mxu0 0.0
    %102 = vmatpush1.msra.mxu0 0.0
    %103 = vmatprep.subr.mxu0 0.0
    %104 = vmatpush1.msra.mxu0 0.0
    %105 = vmatprep.mubr.f32.mxu0 0.0
    %106 = vmatmul.mubr.f32.gmra.mrb[0].mxu0 %v40
    %v107 = vpop.f32.mrb[0].mxu0
    %v108 = vadd.f32 0.0, %v107
    %v109 = vpop.f32.mrb[0].mxu0
    %110 = vdwg.mxu0
    %v111 = vld [vmem:[%s1] sm:$0xf]
    %112 = vmatprep.subr.mxu0 0.0
    %113 = vmatpush1.msra.mxu0 %v24
    %114 = vmatprep.subr.mxu0 0.0
    %115 = vmatpush1.msra.mxu0 %v25
    %116 = vmatprep.subr.mxu0 0.0
    %117 = vmatpush1.msra.mxu0 %v26
    %118 = vmatprep.subr.mxu0 0.0
    %119 = vmatpush1.msra.mxu0 %v27
    %120 = vmatprep.subr.mxu0 0.0
    %121 = vmatpush1.msra.mxu0 %v28
    %122 = vmatprep.subr.mxu0 0.0
    %123 = vmatpush1.msra.mxu0 %v29
    %124 = vmatprep.subr.mxu0 0.0
    %125 = vmatpush1.msra.mxu0 %v30
    %126 = vmatprep.subr.mxu0 0.0
    %127 = vmatpush1.msra.mxu0 %v31
    %128 = vmatprep.subr.mxu0 0.0
    %129 = vmatpush1.msra.mxu0 %v32
    %130 = vmatprep.subr.mxu0 0.0
    %131 = vmatpush1.msra.mxu0 %v33
    %132 = vmatprep.subr.mxu0 0.0
    %133 = vmatpush1.msra.mxu0 %v34
    %134 = vmatprep.subr.mxu0 0.0
    %135 = vmatpush1.msra.mxu0 %v35
    %136 = vmatprep.subr.mxu0 0.0
    %137 = vmatpush1.msra.mxu0 %v36
    %138 = vmatprep.subr.mxu0 0.0
    %139 = vmatpush1.msra.mxu0 %v37
    %140 = vmatprep.subr.mxu0 0.0
    %141 = vmatpush1.msra.mxu0 %v38
    %142 = vmatprep.subr.mxu0 0.0
    %143 = vmatpush1.msra.mxu0 %v39
    %144 = vmatprep.subr.mxu0 0.0
    %145 = vmatpush1.msra.mxu0 0.0
    %146 = vmatprep.subr.mxu0 0.0
    %147 = vmatpush1.msra.mxu0 0.0
    %148 = vmatprep.subr.mxu0 0.0
    %149 = vmatpush1.msra.mxu0 0.0
    %150 = vmatprep.subr.mxu0 0.0
    %151 = vmatpush1.msra.mxu0 0.0
    %152 = vmatprep.subr.mxu0 0.0
    %153 = vmatpush1.msra.mxu0 0.0
    %154 = vmatprep.subr.mxu0 0.0
    %155 = vmatpush1.msra.mxu0 0.0
    %156 = vmatprep.subr.mxu0 0.0
    %157 = vmatpush1.msra.mxu0 0.0
    %158 = vmatprep.subr.mxu0 0.0
    %159 = vmatpush1.msra.mxu0 0.0
    %160 = vmatprep.subr.mxu0 0.0
    %161 = vmatpush1.msra.mxu0 0.0
    %162 = vmatprep.subr.mxu0 0.0
    %163 = vmatpush1.msra.mxu0 0.0
    %164 = vmatprep.subr.mxu0 0.0
    %165 = vmatpush1.msra.mxu0 0.0
    %166 = vmatprep.subr.mxu0 0.0
    %167 = vmatpush1.msra.mxu0 0.0
    %168 = vmatprep.subr.mxu0 0.0
    %169 = vmatpush1.msra.mxu0 0.0
    %170 = vmatprep.subr.mxu0 0.0
    %171 = vmatpush1.msra.mxu0 0.0
    %172 = vmatprep.subr.mxu0 0.0
    %173 = vmatpush1.msra.mxu0 0.0
    %174 = vmatprep.subr.mxu0 0.0
    %175 = vmatpush1.msra.mxu0 0.0
    %176 = vmatprep.mubr.f32.mxu0 0.0
    %177 = vmatmul.mubr.f32.gmra.mrb[0].mxu0 %v111
    %v178 = vpop.f32.mrb[0].mxu0
    %v179 = vadd.f32 0.0, %v178
    %v180 = vpop.f32.mrb[0].mxu0
    %181 = vdwg.mxu0
    %v182 = vld [vmem:[%s2] sm:$0xf]
    %183 = vmatprep.subr.mxu0 0.0
    %184 = vmatpush1.msra.mxu0 %v24
    %185 = vmatprep.subr.mxu0 0.0
    %186 = vmatpush1.msra.mxu0 %v25
    %187 = vmatprep.subr.mxu0 0.0
    %188 = vmatpush1.msra.mxu0 %v26
    %189 = vmatprep.subr.mxu0 0.0
    %190 = vmatpush1.msra.mxu0 %v27
    %191 = vmatprep.subr.mxu0 0.0
    %192 = vmatpush1.msra.mxu0 %v28
    %193 = vmatprep.subr.mxu0 0.0
    %194 = vmatpush1.msra.mxu0 %v29
    %195 = vmatprep.subr.mxu0 0.0
    %196 = vmatpush1.msra.mxu0 %v30
    %197 = vmatprep.subr.mxu0 0.0
    %198 = vmatpush1.msra.mxu0 %v31
    %199 = vmatprep.subr.mxu0 0.0
    %200 = vmatpush1.msra.mxu0 %v32
    %201 = vmatprep.subr.mxu0 0.0
    %202 = vmatpush1.msra.mxu0 %v33
    %203 = vmatprep.subr.mxu0 0.0
    %204 = vmatpush1.msra.mxu0 %v34
    %205 = vmatprep.subr.mxu0 0.0
    %206 = vmatpush1.msra.mxu0 %v35
    %207 = vmatprep.subr.mxu0 0.0
    %208 = vmatpush1.msra.mxu0 %v36
    %209 = vmatprep.subr.mxu0 0.0
    %210 = vmatpush1.msra.mxu0 %v37
    %211 = vmatprep.subr.mxu0 0.0
    %212 = vmatpush1.msra.mxu0 %v38
    %213 = vmatprep.subr.mxu0 0.0
    %214 = vmatpush1.msra.mxu0 %v39
    %215 = vmatprep.subr.mxu0 0.0
    %216 = vmatpush1.msra.mxu0 0.0
    %217 = vmatprep.subr.mxu0 0.0
    %218 = vmatpush1.msra.mxu0 0.0
    %219 = vmatprep.subr.mxu0 0.0
    %220 = vmatpush1.msra.mxu0 0.0
    %221 = vmatprep.subr.mxu0 0.0
    %222 = vmatpush1.msra.mxu0 0.0
    %223 = vmatprep.subr.mxu0 0.0
    %224 = vmatpush1.msra.mxu0 0.0
    %225 = vmatprep.subr.mxu0 0.0
    %226 = vmatpush1.msra.mxu0 0.0
    %227 = vmatprep.subr.mxu0 0.0
    %228 = vmatpush1.msra.mxu0 0.0
    %229 = vmatprep.subr.mxu0 0.0
    %230 = vmatpush1.msra.mxu0 0.0
    %231 = vmatprep.subr.mxu0 0.0
    %232 = vmatpush1.msra.mxu0 0.0
    %233 = vmatprep.subr.mxu0 0.0
    %234 = vmatpush1.msra.mxu0 0.0
    %235 = vmatprep.subr.mxu0 0.0
    %236 = vmatpush1.msra.mxu0 0.0
    %237 = vmatprep.subr.mxu0 0.0
    %238 = vmatpush1.msra.mxu0 0.0
    %239 = vmatprep.subr.mxu0 0.0
    %240 = vmatpush1.msra.mxu0 0.0
    %241 = vmatprep.subr.mxu0 0.0
    %242 = vmatpush1.msra.mxu0 0.0
    %243 = vmatprep.subr.mxu0 0.0
    %244 = vmatpush1.msra.mxu0 0.0
    %245 = vmatprep.subr.mxu0 0.0
    %246 = vmatpush1.msra.mxu0 0.0
    %247 = vmatprep.mubr.f32.mxu0 0.0
    %248 = vmatmul.mubr.f32.gmra.mrb[0].mxu0 %v182
    %v249 = vpop.f32.mrb[0].mxu0
    %v250 = vadd.f32 0.0, %v249
    %v251 = vpop.f32.mrb[0].mxu0
    %252 = vdwg.mxu0
    %v253 = vld [vmem:[%s3] sm:$0xf]
    %254 = vmatprep.subr.mxu0 0.0
    %255 = vmatpush1.msra.mxu0 %v24
    %256 = vmatprep.subr.mxu0 0.0
    %257 = vmatpush1.msra.mxu0 %v25
    %258 = vmatprep.subr.mxu0 0.0
    %259 = vmatpush1.msra.mxu0 %v26
    %260 = vmatprep.subr.mxu0 0.0
    %261 = vmatpush1.msra.mxu0 %v27
    %262 = vmatprep.subr.mxu0 0.0
    %263 = vmatpush1.msra.mxu0 %v28
    %264 = vmatprep.subr.mxu0 0.0
    %265 = vmatpush1.msra.mxu0 %v29
    %266 = vmatprep.subr.mxu0 0.0
    %267 = vmatpush1.msra.mxu0 %v30
    %268 = vmatprep.subr.mxu0 0.0
    %269 = vmatpush1.msra.mxu0 %v31
    %270 = vmatprep.subr.mxu0 0.0
    %271 = vmatpush1.msra.mxu0 %v32
    %272 = vmatprep.subr.mxu0 0.0
    %273 = vmatpush1.msra.mxu0 %v33
    %274 = vmatprep.subr.mxu0 0.0
    %275 = vmatpush1.msra.mxu0 %v34
    %276 = vmatprep.subr.mxu0 0.0
    %277 = vmatpush1.msra.mxu0 %v35
    %278 = vmatprep.subr.mxu0 0.0
    %279 = vmatpush1.msra.mxu0 %v36
    %280 = vmatprep.subr.mxu0 0.0
    %281 = vmatpush1.msra.mxu0 %v37
    %282 = vmatprep.subr.mxu0 0.0
    %283 = vmatpush1.msra.mxu0 %v38
    %284 = vmatprep.subr.mxu0 0.0
    %285 = vmatpush1.msra.mxu0 %v39
    %286 = vmatprep.subr.mxu0 0.0
    %287 = vmatpush1.msra.mxu0 0.0
    %288 = vmatprep.subr.mxu0 0.0
    %289 = vmatpush1.msra.mxu0 0.0
    %290 = vmatprep.subr.mxu0 0.0
    %291 = vmatpush1.msra.mxu0 0.0
    %292 = vmatprep.subr.mxu0 0.0
    %293 = vmatpush1.msra.mxu0 0.0
    %294 = vmatprep.subr.mxu0 0.0
    %295 = vmatpush1.msra.mxu0 0.0
    %296 = vmatprep.subr.mxu0 0.0
    %297 = vmatpush1.msra.mxu0 0.0
    %298 = vmatprep.subr.mxu0 0.0
    %299 = vmatpush1.msra.mxu0 0.0
    %300 = vmatprep.subr.mxu0 0.0
    %301 = vmatpush1.msra.mxu0 0.0
    %302 = vmatprep.subr.mxu0 0.0
    %303 = vmatpush1.msra.mxu0 0.0
    %304 = vmatprep.subr.mxu0 0.0
    %305 = vmatpush1.msra.mxu0 0.0
    %306 = vmatprep.subr.mxu0 0.0
    %307 = vmatpush1.msra.mxu0 0.0
    %308 = vmatprep.subr.mxu0 0.0
    %309 = vmatpush1.msra.mxu0 0.0
    %310 = vmatprep.subr.mxu0 0.0
    %311 = vmatpush1.msra.mxu0 0.0
    %312 = vmatprep.subr.mxu0 0.0
    %313 = vmatpush1.msra.mxu0 0.0
    %314 = vmatprep.subr.mxu0 0.0
    %315 = vmatpush1.msra.mxu0 0.0
    %316 = vmatprep.subr.mxu0 0.0
    %317 = vmatpush1.msra.mxu0 0.0
    %318 = vmatprep.mubr.f32.mxu0 0.0
    %319 = vmatmul.mubr.f32.gmra.mrb[0].mxu0 %v253
    %v320 = vpop.f32.mrb[0].mxu0
    %v321 = vadd.f32 0.0, %v320
    %v322 = vpop.f32.mrb[0].mxu0
    %323 = vdwg.mxu0
    %v324 = vmax.f32 %v108, %v179
    %v325 = vmax.f32 %v324, %v250
    %v326 = vmax.f32 %v325, %v321
    %v327 = vsub.f32 %v108, %v326
    %v328 = vmul.f32 %v327, 1.442695
    %v329 = vpow.pop %v328
    %v330 = vsub.f32 %v179, %v326
    %v331 = vmul.f32 %v330, 1.442695
    %v332 = vpow.pop %v331
    %v333 = vsub.f32 %v250, %v326
    %v334 = vmul.f32 %v333, 1.442695
    %v335 = vpow.pop %v334
    %v336 = vsub.f32 %v321, %v326
    %v337 = vmul.f32 %v336, 1.442695
    %v338 = vpow.pop %v337
    %v339 = vadd.f32 %v329, %v332
    %v340 = vadd.f32 %v339, %v335
    %v341 = vadd.f32 %v340, %v338
    %v342 = vrcp.pop %v341
    %v343 = vmul.f32 %v329, %v342
    %v344 = vld [vmem:[%s5] sm:$0xf]
    %vm345 = vcmask 31744
    %v347 = vsel %vm345, %v343, 0
    %vm349 = vcmask 1043456
    %v351 = vsel %vm349, %v344, 0
    %353 = vmatprep.subr.mxu0 0.0
    %354 = vmatpush1.msra.mxu0 %v351
    %355 = vmatprep.subr.mxu0 0.0
    %356 = vmatpush1.msra.mxu0 0.0
    %357 = vmatprep.subr.mxu0 0.0
    %358 = vmatpush1.msra.mxu0 0.0
    %359 = vmatprep.subr.mxu0 0.0
    %360 = vmatpush1.msra.mxu0 0.0
    %361 = vmatprep.subr.mxu0 0.0
    %362 = vmatpush1.msra.mxu0 0.0
    %363 = vmatprep.subr.mxu0 0.0
    %364 = vmatpush1.msra.mxu0 0.0
    %365 = vmatprep.subr.mxu0 0.0
    %366 = vmatpush1.msra.mxu0 0.0
    %367 = vmatprep.subr.mxu0 0.0
    %368 = vmatpush1.msra.mxu0 0.0
    %369 = vmatprep.subr.mxu0 0.0
    %370 = vmatpush1.msra.mxu0 0.0
    %371 = vmatprep.subr.mxu0 0.0
    %372 = vmatpush1.msra.mxu0 0.0
    %373 = vmatprep.subr.mxu0 0.0
    %374 = vmatpush1.msra.mxu0 0.0
    %375 = vmatprep.subr.mxu0 0.0
    %376 = vmatpush1.msra.mxu0 0.0
    %377 = vmatprep.subr.mxu0 0.0
    %378 = vmatpush1.msra.mxu0 0.0
    %379 = vmatprep.subr.mxu0 0.0
    %380 = vmatpush1.msra.mxu0 0.0
    %381 = vmatprep.subr.mxu0 0.0
    %382 = vmatpush1.msra.mxu0 0.0
    %383 = vmatprep.subr.mxu0 0.0
    %384 = vmatpush1.msra.mxu0 0.0
    %385 = vmatprep.subr.mxu0 0.0
    %386 = vmatpush1.msra.mxu0 0.0
    %387 = vmatprep.subr.mxu0 0.0
    %388 = vmatpush1.msra.mxu0 0.0
    %389 = vmatprep.subr.mxu0 0.0
    %390 = vmatpush1.msra.mxu0 0.0
    %391 = vmatprep.subr.mxu0 0.0
    %392 = vmatpush1.msra.mxu0 0.0
    %393 = vmatprep.subr.mxu0 0.0
    %394 = vmatpush1.msra.mxu0 0.0
    %395 = vmatprep.subr.mxu0 0.0
    %396 = vmatpush1.msra.mxu0 0.0
    %397 = vmatprep.subr.mxu0 0.0
    %398 = vmatpush1.msra.mxu0 0.0
    %399 = vmatprep.subr.mxu0 0.0
    %400 = vmatpush1.msra.mxu0 0.0
    %401 = vmatprep.subr.mxu0 0.0
    %402 = vmatpush1.msra.mxu0 0.0
    %403 = vmatprep.subr.mxu0 0.0
    %404 = vmatpush1.msra.mxu0 0.0
    %405 = vmatprep.subr.mxu0 0.0
    %406 = vmatpush1.msra.mxu0 0.0
    %407 = vmatprep.subr.mxu0 0.0
    %408 = vmatpush1.msra.mxu0 0.0
    %409 = vmatprep.subr.mxu0 0.0
    %410 = vmatpush1.msra.mxu0 0.0
    %411 = vmatprep.subr.mxu0 0.0
    %412 = vmatpush1.msra.mxu0 0.0
    %413 = vmatprep.subr.mxu0 0.0
    %414 = vmatpush1.msra.mxu0 0.0
    %415 = vmatprep.subr.mxu0 0.0
    %416 = vmatpush1.msra.mxu0 0.0
    %417 = vmatprep.mubr.f32.mxu0 0.0
    %418 = vmatmul.mubr.f32.gmra.mrb[0].mxu0 %v347
    %v419 = vpop.f32.mrb[0].mxu0
    %v420 = vadd.f32 0.0, %v419
    %v421 = vpop.f32.mrb[0].mxu0
    %422 = vdwg.mxu0
    %v423 = vmul.f32 %v40, %v420
    %v424 = vmul.f32 %v332, %v342
    %v426 = vsel %vm345, %v424, 0
    %428 = vmatprep.subr.mxu0 0.0
    %429 = vmatpush1.msra.mxu0 %v351
    %430 = vmatprep.subr.mxu0 0.0
    %431 = vmatpush1.msra.mxu0 0.0
    %432 = vmatprep.subr.mxu0 0.0
    %433 = vmatpush1.msra.mxu0 0.0
    %434 = vmatprep.subr.mxu0 0.0
    %435 = vmatpush1.msra.mxu0 0.0
    %436 = vmatprep.subr.mxu0 0.0
    %437 = vmatpush1.msra.mxu0 0.0
    %438 = vmatprep.subr.mxu0 0.0
    %439 = vmatpush1.msra.mxu0 0.0
    %440 = vmatprep.subr.mxu0 0.0
    %441 = vmatpush1.msra.mxu0 0.0
    %442 = vmatprep.subr.mxu0 0.0
    %443 = vmatpush1.msra.mxu0 0.0
    %444 = vmatprep.subr.mxu0 0.0
    %445 = vmatpush1.msra.mxu0 0.0
    %446 = vmatprep.subr.mxu0 0.0
    %447 = vmatpush1.msra.mxu0 0.0
    %448 = vmatprep.subr.mxu0 0.0
    %449 = vmatpush1.msra.mxu0 0.0
    %450 = vmatprep.subr.mxu0 0.0
    %451 = vmatpush1.msra.mxu0 0.0
    %452 = vmatprep.subr.mxu0 0.0
    %453 = vmatpush1.msra.mxu0 0.0
    %454 = vmatprep.subr.mxu0 0.0
    %455 = vmatpush1.msra.mxu0 0.0
    %456 = vmatprep.subr.mxu0 0.0
    %457 = vmatpush1.msra.mxu0 0.0
    %458 = vmatprep.subr.mxu0 0.0
    %459 = vmatpush1.msra.mxu0 0.0
    %460 = vmatprep.subr.mxu0 0.0
    %461 = vmatpush1.msra.mxu0 0.0
    %462 = vmatprep.subr.mxu0 0.0
    %463 = vmatpush1.msra.mxu0 0.0
    %464 = vmatprep.subr.mxu0 0.0
    %465 = vmatpush1.msra.mxu0 0.0
    %466 = vmatprep.subr.mxu0 0.0
    %467 = vmatpush1.msra.mxu0 0.0
    %468 = vmatprep.subr.mxu0 0.0
    %469 = vmatpush1.msra.mxu0 0.0
    %470 = vmatprep.subr.mxu0 0.0
    %471 = vmatpush1.msra.mxu0 0.0
    %472 = vmatprep.subr.mxu0 0.0
    %473 = vmatpush1.msra.mxu0 0.0
    %474 = vmatprep.subr.mxu0 0.0
    %475 = vmatpush1.msra.mxu0 0.0
    %476 = vmatprep.subr.mxu0 0.0
    %477 = vmatpush1.msra.mxu0 0.0
    %478 = vmatprep.subr.mxu0 0.0
    %479 = vmatpush1.msra.mxu0 0.0
    %480 = vmatprep.subr.mxu0 0.0
    %481 = vmatpush1.msra.mxu0 0.0
    %482 = vmatprep.subr.mxu0 0.0
    %483 = vmatpush1.msra.mxu0 0.0
    %484 = vmatprep.subr.mxu0 0.0
    %485 = vmatpush1.msra.mxu0 0.0
    %486 = vmatprep.subr.mxu0 0.0
    %487 = vmatpush1.msra.mxu0 0.0
    %488 = vmatprep.subr.mxu0 0.0
    %489 = vmatpush1.msra.mxu0 0.0
    %490 = vmatprep.subr.mxu0 0.0
    %491 = vmatpush1.msra.mxu0 0.0
    %492 = vmatprep.mubr.f32.mxu0 0.0
    %493 = vmatmul.mubr.f32.gmra.mrb[0].mxu0 %v426
    %v494 = vpop.f32.mrb[0].mxu0
    %v495 = vadd.f32 0.0, %v494
    %v496 = vpop.f32.mrb[0].mxu0
    %497 = vdwg.mxu0
    %v498 = vmul.f32 %v111, %v495
    %v499 = vadd.f32 %v423, %v498
    %v500 = vmul.f32 %v335, %v342
    %v502 = vsel %vm345, %v500, 0
    %504 = vmatprep.subr.mxu0 0.0
    %505 = vmatpush1.msra.mxu0 %v351
    %506 = vmatprep.subr.mxu0 0.0
    %507 = vmatpush1.msra.mxu0 0.0
    %508 = vmatprep.subr.mxu0 0.0
    %509 = vmatpush1.msra.mxu0 0.0
    %510 = vmatprep.subr.mxu0 0.0
    %511 = vmatpush1.msra.mxu0 0.0
    %512 = vmatprep.subr.mxu0 0.0
    %513 = vmatpush1.msra.mxu0 0.0
    %514 = vmatprep.subr.mxu0 0.0
    %515 = vmatpush1.msra.mxu0 0.0
    %516 = vmatprep.subr.mxu0 0.0
    %517 = vmatpush1.msra.mxu0 0.0
    %518 = vmatprep.subr.mxu0 0.0
    %519 = vmatpush1.msra.mxu0 0.0
    %520 = vmatprep.subr.mxu0 0.0
    %521 = vmatpush1.msra.mxu0 0.0
    %522 = vmatprep.subr.mxu0 0.0
    %523 = vmatpush1.msra.mxu0 0.0
    %524 = vmatprep.subr.mxu0 0.0
    %525 = vmatpush1.msra.mxu0 0.0
    %526 = vmatprep.subr.mxu0 0.0
    %527 = vmatpush1.msra.mxu0 0.0
    %528 = vmatprep.subr.mxu0 0.0
    %529 = vmatpush1.msra.mxu0 0.0
    %530 = vmatprep.subr.mxu0 0.0
    %531 = vmatpush1.msra.mxu0 0.0
    %532 = vmatprep.subr.mxu0 0.0
    %533 = vmatpush1.msra.mxu0 0.0
    %534 = vmatprep.subr.mxu0 0.0
    %535 = vmatpush1.msra.mxu0 0.0
    %536 = vmatprep.subr.mxu0 0.0
    %537 = vmatpush1.msra.mxu0 0.0
    %538 = vmatprep.subr.mxu0 0.0
    %539 = vmatpush1.msra.mxu0 0.0
    %540 = vmatprep.subr.mxu0 0.0
    %541 = vmatpush1.msra.mxu0 0.0
    %542 = vmatprep.subr.mxu0 0.0
    %543 = vmatpush1.msra.mxu0 0.0
    %544 = vmatprep.subr.mxu0 0.0
    %545 = vmatpush1.msra.mxu0 0.0
    %546 = vmatprep.subr.mxu0 0.0
    %547 = vmatpush1.msra.mxu0 0.0
    %548 = vmatprep.subr.mxu0 0.0
    %549 = vmatpush1.msra.mxu0 0.0
    %550 = vmatprep.subr.mxu0 0.0
    %551 = vmatpush1.msra.mxu0 0.0
    %552 = vmatprep.subr.mxu0 0.0
    %553 = vmatpush1.msra.mxu0 0.0
    %554 = vmatprep.subr.mxu0 0.0
    %555 = vmatpush1.msra.mxu0 0.0
    %556 = vmatprep.subr.mxu0 0.0
    %557 = vmatpush1.msra.mxu0 0.0
    %558 = vmatprep.subr.mxu0 0.0
    %559 = vmatpush1.msra.mxu0 0.0
    %560 = vmatprep.subr.mxu0 0.0
    %561 = vmatpush1.msra.mxu0 0.0
    %562 = vmatprep.subr.mxu0 0.0
    %563 = vmatpush1.msra.mxu0 0.0
    %564 = vmatprep.subr.mxu0 0.0
    %565 = vmatpush1.msra.mxu0 0.0
    %566 = vmatprep.subr.mxu0 0.0
    %567 = vmatpush1.msra.mxu0 0.0
    %568 = vmatprep.mubr.f32.mxu0 0.0
    %569 = vmatmul.mubr.f32.gmra.mrb[0].mxu0 %v502
    %v570 = vpop.f32.mrb[0].mxu0
    %v571 = vadd.f32 0.0, %v570
    %v572 = vpop.f32.mrb[0].mxu0
    %573 = vdwg.mxu0
    %v574 = vmul.f32 %v182, %v571
    %v575 = vadd.f32 %v499, %v574
    %v576 = vmul.f32 %v338, %v342
    %v578 = vsel %vm345, %v576, 0
    %580 = vmatprep.subr.mxu0 0.0
    %581 = vmatpush1.msra.mxu0 %v351
    %582 = vmatprep.subr.mxu0 0.0
    %583 = vmatpush1.msra.mxu0 0.0
    %584 = vmatprep.subr.mxu0 0.0
    %585 = vmatpush1.msra.mxu0 0.0
    %586 = vmatprep.subr.mxu0 0.0
    %587 = vmatpush1.msra.mxu0 0.0
    %588 = vmatprep.subr.mxu0 0.0
    %589 = vmatpush1.msra.mxu0 0.0
    %590 = vmatprep.subr.mxu0 0.0
    %591 = vmatpush1.msra.mxu0 0.0
    %592 = vmatprep.subr.mxu0 0.0
    %593 = vmatpush1.msra.mxu0 0.0
    %594 = vmatprep.subr.mxu0 0.0
    %595 = vmatpush1.msra.mxu0 0.0
    %596 = vmatprep.subr.mxu0 0.0
    %597 = vmatpush1.msra.mxu0 0.0
    %598 = vmatprep.subr.mxu0 0.0
    %599 = vmatpush1.msra.mxu0 0.0
    %600 = vmatprep.subr.mxu0 0.0
    %601 = vmatpush1.msra.mxu0 0.0
    %602 = vmatprep.subr.mxu0 0.0
    %603 = vmatpush1.msra.mxu0 0.0
    %604 = vmatprep.subr.mxu0 0.0
    %605 = vmatpush1.msra.mxu0 0.0
    %606 = vmatprep.subr.mxu0 0.0
    %607 = vmatpush1.msra.mxu0 0.0
    %608 = vmatprep.subr.mxu0 0.0
    %609 = vmatpush1.msra.mxu0 0.0
    %610 = vmatprep.subr.mxu0 0.0
    %611 = vmatpush1.msra.mxu0 0.0
    %612 = vmatprep.subr.mxu0 0.0
    %613 = vmatpush1.msra.mxu0 0.0
    %614 = vmatprep.subr.mxu0 0.0
    %615 = vmatpush1.msra.mxu0 0.0
    %616 = vmatprep.subr.mxu0 0.0
    %617 = vmatpush1.msra.mxu0 0.0
    %618 = vmatprep.subr.mxu0 0.0
    %619 = vmatpush1.msra.mxu0 0.0
    %620 = vmatprep.subr.mxu0 0.0
    %621 = vmatpush1.msra.mxu0 0.0
    %622 = vmatprep.subr.mxu0 0.0
    %623 = vmatpush1.msra.mxu0 0.0
    %624 = vmatprep.subr.mxu0 0.0
    %625 = vmatpush1.msra.mxu0 0.0
    %626 = vmatprep.subr.mxu0 0.0
    %627 = vmatpush1.msra.mxu0 0.0
    %628 = vmatprep.subr.mxu0 0.0
    %629 = vmatpush1.msra.mxu0 0.0
    %630 = vmatprep.subr.mxu0 0.0
    %631 = vmatpush1.msra.mxu0 0.0
    %632 = vmatprep.subr.mxu0 0.0
    %633 = vmatpush1.msra.mxu0 0.0
    %634 = vmatprep.subr.mxu0 0.0
    %635 = vmatpush1.msra.mxu0 0.0
    %636 = vmatprep.subr.mxu0 0.0
    %637 = vmatpush1.msra.mxu0 0.0
    %638 = vmatprep.subr.mxu0 0.0
    %639 = vmatpush1.msra.mxu0 0.0
    %640 = vmatprep.subr.mxu0 0.0
    %641 = vmatpush1.msra.mxu0 0.0
    %642 = vmatprep.subr.mxu0 0.0
    %643 = vmatpush1.msra.mxu0 0.0
    %644 = vmatprep.mubr.f32.mxu0 0.0
    %645 = vmatmul.mubr.f32.gmra.mrb[0].mxu0 %v578
    %v646 = vpop.f32.mrb[0].mxu0
    %v647 = vadd.f32 0.0, %v646
    %v648 = vpop.f32.mrb[0].mxu0
    %649 = vdwg.mxu0
    %v650 = vmul.f32 %v253, %v647
    %v651 = vadd.f32 %v575, %v650
    %652 = vst [vmem:[#allocation2] sm:$0xf] %v651
    // Predicated region
    $region26: #{tpu_custom_call.1} parent=1 // pred_check
      _
    $region27: #{tpu_custom_call.1} parent=1 // pred_check_branch
      %654 = sbr.rel (0) target = $region29
    $region28: #{tpu_custom_call.1} parent=1 // pred_region
      %s656 = ssub.s32 64, 64
      %657 = vsyncadd [#allocation3], %s656
      %s659 = sshll.u32 [#allocation2], 4
      %s660 = int_to_ptr.vmem [resolvable:$true] %s659
      %662 = dma.vmem_to_hbm [thread:$0]  %s660, 64, %s6, [#allocation3]
    $region29: #{tpu_custom_call.1} parent=1 // pred_fallthru
      _
    // Predicated region
    $region30: #{tpu_custom_call.1} parent=1 // pred_check
      _
    $region31: #{tpu_custom_call.1} parent=1 // pred_check_branch
      %664 = sbr.rel (0) target = $region33
    $region32: #{tpu_custom_call.1} parent=1 // pred_region
      %665 = dma.done [#allocation3], 64
    $region33: #{tpu_custom_call.1} parent=1 // pred_fallthru
      _
    %666 = vsyncpa [#allocation3], 1

</llo_original>
